<compile_context>
chip_gen: v6e
topology: v6e:2x2x1
jax: 0.10.0
libtpu: 0.0.40
codegen_flags: <defaults>
</compile_context>

<pallas_src>
import functools

import jax
import jax.numpy as jnp
from jax import lax
from jax.experimental import pallas as pl
from jax.experimental.pallas import tpu as pltpu


def _round_up(x, m):
    return ((x + m - 1) // m) * m


def _vmem_capacity_bytes():
    # v5e/v6e: 128 MiB, v7x: 64 MiB (per TensorCore).  Query when possible,
    # otherwise assume the smallest so the resident path never over-commits.
    try:
        return int(pltpu.get_tpu_info().vmem_capacity_bytes)
    except Exception:
        return 64 * 1024 * 1024


# ---------------------------------------------------------------------------
# Shared per-tile loss math.
# ---------------------------------------------------------------------------
def _tile_loss(u, i_emb, s, tile_start, tb, real_b, lamda_u, lamda_v):
    """u, i_emb: (TB, D) f32; s: (TB, 1) f32. Returns scalar partial sum."""
    x_ui = jnp.sum(u * i_emb, axis=1, keepdims=True)                  # (TB, 1)
    # Stable single-branch log-sigmoid: -(max(-x,0) + log1p(exp(-|x|)))
    log_sig = -(jnp.maximum(-x_ui, 0.0) + jnp.log1p(jnp.exp(-jnp.abs(x_ui))))
    err = s - log_sig
    # Fused regularizer: one cross-lane reduce instead of two.
    reg = jnp.sum(lamda_u * (u * u) + lamda_v * (i_emb * i_emb),
                  axis=1, keepdims=True)
    per_row = err * err + reg                                          # (TB, 1)
    rows = tile_start + lax.broadcasted_iota(jnp.int32, (tb, 1), 0)
    per_row = jnp.where(rows < real_b, per_row, 0.0)
    return jnp.sum(per_row)


# ---------------------------------------------------------------------------
# Fast path: tables resident in VMEM, gather as a one-hot matmul on the MXU.
# ---------------------------------------------------------------------------
def _pmf_resident_kernel(u_idx_ref, i_idx_ref, s_ref, w_ref, h_ref,
                         out_ref, acc_ref, *,
                         lamda_u, lamda_v, batch_size, real_b, tile_rows):
    t = pl.program_id(0)
    tb = tile_rows

    @pl.when(t == 0)
    def _():
        acc_ref[...] = jnp.zeros_like(acc_ref)

    u_idx = u_idx_ref[...]                       # (TB, 1) int32
    i_idx = i_idx_ref[...]                       # (TB, 1) int32
    n_users = w_ref.shape[0]
    n_items = h_ref.shape[0]

    # On-chip gather: one-hot rows x resident table (MXU), native table dtype.
    onehot_u = (u_idx == lax.broadcasted_iota(jnp.int32, (tb, n_users), 1)
                ).astype(w_ref.dtype)
    onehot_i = (i_idx == lax.broadcasted_iota(jnp.int32, (tb, n_items), 1)
                ).astype(h_ref.dtype)
    u = jnp.dot(onehot_u, w_ref[...], preferred_element_type=jnp.float32)
    i_emb = jnp.dot(onehot_i, h_ref[...], preferred_element_type=jnp.float32)

    acc_ref[...] = acc_ref[...] + _tile_loss(
        u, i_emb, s_ref[...], t * tb, tb, real_b, lamda_u, lamda_v)

    @pl.when(t == pl.num_programs(0) - 1)
    def _():
        val = acc_ref[...] * jnp.float32(1.0 / batch_size)             # (1, 1)
        out_ref[...] = jnp.broadcast_to(val, out_ref.shape)


def _pmf_loss_resident(W, H, u_idx, i_idx, s, *, lamda_u, lamda_v, batch_size,
                       tile_rows, vmem_cap):
    B = int(u_idx.shape[0])
    n_users, D = W.shape
    n_items = H.shape[0]
    itemsize = max(W.dtype.itemsize, H.dtype.itemsize)

    if tile_rows is None:
        # Keep the (TB, U) / (TB, I) one-hot intermediates modest (~2 MiB).
        tb = (2 * 1024 * 1024) // max(4 * (n_users + n_items), 1)
        tb = min(max(tb, 8), 1024)
        tb = min(tb, _round_up(B, 8))
    else:
        tb = int(tile_rows)
    tb = max(8, (tb // 8) * 8)

    num_tiles = -(-B // tb)
    b_pad = num_tiles * tb

    u_p = jnp.zeros((b_pad, 1), jnp.int32).at[:B, 0].set(u_idx.astype(jnp.int32))
    i_p = jnp.zeros((b_pad, 1), jnp.int32).at[:B, 0].set(i_idx.astype(jnp.int32))
    s_p = jnp.zeros((b_pad, 1), jnp.float32).at[:B, 0].set(s.astype(jnp.float32))

    kernel = functools.partial(
        _pmf_resident_kernel, lamda_u=float(lamda_u), lamda_v=float(lamda_v),
        batch_size=int(batch_size), real_b=B, tile_rows=tb)

    # VMEM estimate: tables (x2 pipeline buffers each), lane-padded (TB,1)
    # input blocks (x2 buffers x3 inputs), output, slack.
    padded_tbl = ((_round_up(n_users, 8) + _round_up(n_items, 8))
                  * _round_up(D, 128) * itemsize)
    est = 2 * padded_tbl + 3 * 2 * tb * 128 * 4 + 2 * 8 * 128 * 4 + (4 << 20)
    vmem_limit = int(min(vmem_cap - (2 << 20), max(32 << 20, est)))

    grid_spec = pltpu.PrefetchScalarGridSpec(
        num_scalar_prefetch=0,
        grid=(num_tiles,),
        in_specs=[
            pl.BlockSpec((tb, 1), lambda t: (t, 0)),
            pl.BlockSpec((tb, 1), lambda t: (t, 0)),
            pl.BlockSpec((tb, 1), lambda t: (t, 0)),
            pl.BlockSpec((n_users, D), lambda t: (0, 0)),  # resident (DMA'd once)
            pl.BlockSpec((n_items, D), lambda t: (0, 0)),  # resident (DMA'd once)
        ],
        out_specs=pl.BlockSpec((8, 128), lambda t: (0, 0)),
        scratch_shapes=[pltpu.VMEM((1, 1), jnp.float32)],
    )

    cost = pl.CostEstimate(
        flops=int(2 * b_pad * (n_users + n_items) * D + 8 * b_pad * D),
        transcendentals=int(2 * b_pad),
        bytes_accessed=int((n_users + n_items) * D * itemsize
                           + 12 * b_pad + 8 * 128 * 4),
    )

    out = pl.pallas_call(
        kernel,
        out_shape=jax.ShapeDtypeStruct((8, 128), jnp.float32),
        grid_spec=grid_spec,
        compiler_params=pltpu.CompilerParams(
            dimension_semantics=("arbitrary",),
            vmem_limit_bytes=vmem_limit),
        cost_estimate=cost,
    )(u_p, i_p, s_p, W, H)
    return out[0, 0]


# ---------------------------------------------------------------------------
# Fallback: manual double-buffered HBM row-gather (tables too big for VMEM).
# ---------------------------------------------------------------------------
def _pmf_gather_kernel(u_idx_ref, i_idx_ref, s_ref, w_hbm, h_hbm,
                       out_ref, u_buf, i_buf, sems, acc_ref, *,
                       lamda_u, lamda_v, batch_size, real_b, tile_rows):
    t = pl.program_id(0)
    n_t = pl.num_programs(0)
    tb = tile_rows

    def start_gather(tile_idx, slot):
        base = tile_idx * tb

        # 4-row unrolled issue loop: interleave SMEM index loads, address
        # math and W/H descriptor pushes so the misc slot stays busy.
        @pl.loop(0, tb // 4)
        def _(q):
            r = q * 4
            for k in range(4):
                u_row = u_idx_ref[base + r + k]
                i_row = i_idx_ref[base + r + k]
                pltpu.make_async_copy(
                    w_hbm.at[pl.ds(u_row, 1)],
                    u_buf.at[slot, pl.ds(r + k, 1)],
                    sems.at[0, slot]).start()
                pltpu.make_async_copy(
                    h_hbm.at[pl.ds(i_row, 1)],
                    i_buf.at[slot, pl.ds(r + k, 1)],
                    sems.at[1, slot]).start()

    def wait_gather(slot):
        # Single wait per table per slot.  DMA semaphores count bytes, so a
        # descriptor spanning the whole tile (TB rows) retires all of this
        # slot's row-copies in one shot.  (src/dst here only size the wait;
        # byte accounting is per-table, so mixed W/H dtypes stay correct.)
        pltpu.make_async_copy(u_buf.at[0], u_buf.at[1], sems.at[0, slot]).wait()
        pltpu.make_async_copy(i_buf.at[0], i_buf.at[1], sems.at[1, slot]).wait()

    slot = lax.rem(t, 2)

    # Prologue: zero accumulator and kick off the first tile's gather.
    @pl.when(t == 0)
    def _():
        acc_ref[...] = jnp.zeros_like(acc_ref)
        start_gather(0, 0)

    # Issue the NEXT tile's gather BEFORE waiting on the current one: the
    # descriptor-issue cost overlaps the in-flight DMAs and all SMEM index
    # reads happen before the .wait().
    @pl.when(t + 1 < n_t)
    def _():
        start_gather(t + 1, 1 - slot)

    wait_gather(slot)

    u = u_buf[slot].astype(jnp.float32)          # (TB, D)
    i_emb = i_buf[slot].astype(jnp.float32)      # (TB, D)

    acc_ref[...] = acc_ref[...] + _tile_loss(
        u, i_emb, s_ref[...], t * tb, tb, real_b, lamda_u, lamda_v)

    @pl.when(t == n_t - 1)
    def _():
        val = acc_ref[...] * jnp.float32(1.0 / batch_size)             # (1, 1)
        out_ref[...] = jnp.broadcast_to(val, out_ref.shape)


def _pmf_loss_gather(W, H, u_idx, i_idx, s, *, lamda_u, lamda_v, batch_size,
                     tile_rows, vmem_cap):
    B = int(u_idx.shape[0])
    n_users, D = W.shape

    # TODO(synk): sub-32-bit tables (bf16/fp8) need packed-row handling for
    # the single-row DMA gather; upcast in this fallback path only (the
    # resident fast path keeps tables in their native dtype).
    if W.dtype.itemsize < 4:
        W = W.astype(jnp.float32)
    if H.dtype.itemsize < 4:
        H = H.astype(jnp.float32)
    itemsize = W.dtype.itemsize

    if tile_rows is None:
        # Gather scratch = 2 tables x 2 slots x TB x D x itemsize; keep ~<=8 MiB
        # and cap at 1024 rows (amortizes per-step + per-tile wait overhead).
        tb = (8 * 1024 * 1024) // max(4 * D * itemsize, 1)
        tb = min(max(tb, 8), 1024)
        tb = min(tb, _round_up(B, 8))
    else:
        tb = int(tile_rows)
    tb = max(8, (tb // 8) * 8)

    num_tiles = -(-B // tb)
    b_pad = num_tiles * tb

    u_p = jnp.zeros((b_pad,), jnp.int32).at[:B].set(u_idx.astype(jnp.int32))
    i_p = jnp.zeros((b_pad,), jnp.int32).at[:B].set(i_idx.astype(jnp.int32))
    s_p = jnp.zeros((b_pad, 1), jnp.float32).at[:B, 0].set(s.astype(jnp.float32))

    kernel = functools.partial(
        _pmf_gather_kernel, lamda_u=float(lamda_u), lamda_v=float(lamda_v),
        batch_size=int(batch_size), real_b=B, tile_rows=tb)

    est = (2 * 2 * tb * _round_up(D, 128) * itemsize      # gather scratch
           + 2 * tb * 128 * 4                             # s blocks (lane-padded)
           + 2 * 8 * 128 * 4 + (4 << 20))
    vmem_limit = int(min(vmem_cap - (2 << 20), max(32 << 20, est)))

    grid_spec = pltpu.PrefetchScalarGridSpec(
        num_scalar_prefetch=2,
        grid=(num_tiles,),
        in_specs=[
            pl.BlockSpec((tb, 1), lambda t, u_r, i_r: (t, 0)),
            pl.BlockSpec(memory_space=pl.ANY),   # W stays in HBM (row gather)
            pl.BlockSpec(memory_space=pl.ANY),   # H stays in HBM (row gather)
        ],
        out_specs=pl.BlockSpec((8, 128), lambda t, u_r, i_r: (0, 0)),
        scratch_shapes=[
            pltpu.VMEM((2, tb, D), W.dtype),
            pltpu.VMEM((2, tb, D), H.dtype),
            pltpu.SemaphoreType.DMA((2, 2)),
            pltpu.VMEM((1, 1), jnp.float32),
        ],
    )

    cost = pl.CostEstimate(
        flops=int(8 * b_pad * D + 8 * b_pad),
        transcendentals=int(2 * b_pad),
        bytes_accessed=int(2 * b_pad * D * itemsize + 12 * b_pad + 8 * 128 * 4),
    )

    out = pl.pallas_call(
        kernel,
        out_shape=jax.ShapeDtypeStruct((8, 128), jnp.float32),
        grid_spec=grid_spec,
        compiler_params=pltpu.CompilerParams(
            dimension_semantics=("arbitrary",),
            vmem_limit_bytes=vmem_limit),
        cost_estimate=cost,
    )(u_p, i_p, s_p, W, H)
    return out[0, 0]


# ---------------------------------------------------------------------------
# Public wrapper.
# ---------------------------------------------------------------------------
def pmf_loss(W, H, u_idx, i_idx, s, *, lamda_u, lamda_v, batch_size,
             tile_rows=None, force_gather=False):
    """PMF loss. u_idx/i_idx are int [B]; s is float [B]; W/H are [*, D]."""
    n_users, D = W.shape
    n_items, D2 = H.shape
    assert D2 == D

    cap = _vmem_capacity_bytes()
    itemsize = max(W.dtype.itemsize, H.dtype.itemsize)
    padded_tbl = ((_round_up(n_users, 8) + _round_up(n_items, 8))
                  * _round_up(D, 128) * itemsize)

    resident = ((not force_gather)
                and max(n_users, n_items) <= 4096
                and 2 * padded_tbl <= cap // 3)

    if resident:
        return _pmf_loss_resident(W, H, u_idx, i_idx, s, lamda_u=lamda_u,
                                  lamda_v=lamda_v, batch_size=batch_size,
                                  tile_rows=tile_rows, vmem_cap=cap)
    return _pmf_loss_gather(W, H, u_idx, i_idx, s, lamda_u=lamda_u,
                            lamda_v=lamda_v, batch_size=batch_size,
                            tile_rows=tile_rows, vmem_cap=cap)


def _reference_loss(W, H, u_idx, i_idx, s, lamda_u, lamda_v, batch_size):
    """Pure-JAX reference mirroring the PyTorch forward exactly."""
    u = W[u_idx, :].astype(jnp.float32)
    i = H[i_idx, :].astype(jnp.float32)
    mult = jnp.matmul(u, i.T, precision=jax.lax.Precision.HIGHEST)
    x_ui = jnp.sum(jnp.eye(mult.shape[0]) * mult, axis=1)
    log_prob = jnp.sum((s.astype(jnp.float32) - jax.nn.log_sigmoid(x_ui)) ** 2)
    reg = (lamda_u * jnp.sum(jnp.linalg.norm(u, axis=1) ** 2)
           + lamda_v * jnp.sum(jnp.linalg.norm(i, axis=1) ** 2))
    return (log_prob + reg) / batch_size


if __name__ == "__main__":
    # Module hyperparameters (small, consistent with the PMF __init__).
    user_size = 32
    item_size = 40
    dim = 32
    batch_size = 8
    lamdaU = 0.1
    lamdaV_1 = 0.05

    key = jax.random.PRNGKey(0)
    kW, kH, kU, kI, kS = jax.random.split(key, 5)

    # Deterministic xavier_normal_ init: std = sqrt(2 / (fan_in + fan_out)).
    stdW = (2.0 / (user_size + dim)) ** 0.5
    stdH = (2.0 / (item_size + dim)) ** 0.5
    W = jax.random.normal(kW, (user_size, dim), dtype=jnp.float32) * stdW
    H = jax.random.normal(kH, (item_size, dim), dtype=jnp.float32) * stdH

    u_idx = jax.random.randint(kU, (batch_size,), 0, user_size, dtype=jnp.int32)
    i_idx = jax.random.randint(kI, (batch_size,), 0, item_size, dtype=jnp.int32)
    s = jax.random.bernoulli(kS, 0.5, (batch_size,)).astype(jnp.float32)

    # 1) Resident-table fast path, single tile.
    loss = jax.block_until_ready(
        pmf_loss(W, H, u_idx, i_idx, s, lamda_u=lamdaU, lamda_v=lamdaV_1,
                 batch_size=batch_size))
    ref = _reference_loss(W, H, u_idx, i_idx, s, lamdaU, lamdaV_1, batch_size)
    assert jnp.allclose(loss, ref, rtol=1e-5, atol=1e-5), (loss, ref)

    # 2) Resident path, multi-tile with a masked padded tail (37 -> 5 tiles).
    B2 = 37
    k2u, k2i, k2s = jax.random.split(jax.random.PRNGKey(1), 3)
    u2 = jax.random.randint(k2u, (B2,), 0, user_size, dtype=jnp.int32)
    i2 = jax.random.randint(k2i, (B2,), 0, item_size, dtype=jnp.int32)
    s2 = jax.random.bernoulli(k2s, 0.5, (B2,)).astype(jnp.float32)
    loss2 = jax.block_until_ready(
        pmf_loss(W, H, u2, i2, s2, lamda_u=lamdaU, lamda_v=lamdaV_1,
                 batch_size=B2, tile_rows=8))
    ref2 = _reference_loss(W, H, u2, i2, s2, lamdaU, lamdaV_1, B2)
    assert jnp.allclose(loss2, ref2, rtol=1e-5, atol=1e-5), (loss2, ref2)

    # 3) DMA-gather fallback forced on: multi-tile, double-buffered, single
    #    wait per table/slot, next-tile issue before current-tile wait.
    loss3 = jax.block_until_ready(
        pmf_loss(W, H, u2, i2, s2, lamda_u=lamdaU, lamda_v=lamdaV_1,
                 batch_size=B2, tile_rows=8, force_gather=True))
    assert jnp.allclose(loss3, ref2, rtol=1e-5, atol=1e-5), (loss3, ref2)

    # 4) bf16 tables on the resident path (kept native, no wrapper upcast).
    Wb, Hb = W.astype(jnp.bfloat16), H.astype(jnp.bfloat16)
    loss4 = jax.block_until_ready(
        pmf_loss(Wb, Hb, u_idx, i_idx, s, lamda_u=lamdaU, lamda_v=lamdaV_1,
                 batch_size=batch_size))
    ref4 = _reference_loss(Wb.astype(jnp.float32), Hb.astype(jnp.float32),
                           u_idx, i_idx, s, lamdaU, lamdaV_1, batch_size)
    assert jnp.allclose(loss4, ref4, rtol=1e-4, atol=1e-4), (loss4, ref4)

    print("KERNEL_OK")
</pallas_src>

<mosaic_0001>
module attributes {stable_mosaic.version = 11 : i64} {
  func.func @_pmf_resident_kernel(%arg0: i32, %arg1: memref<8x1xi32, #tpu.memory_space<vmem>>, %arg2: memref<8x1xi32, #tpu.memory_space<vmem>>, %arg3: memref<8x1xf32, #tpu.memory_space<vmem>>, %arg4: memref<32x32xf32, #tpu.memory_space<vmem>>, %arg5: memref<40x32xf32, #tpu.memory_space<vmem>>, %arg6: memref<8x128xf32, #tpu.memory_space<vmem>>, %arg7: memref<1x1xf32, #tpu.memory_space<vmem>>) attributes {dimension_semantics = [#tpu.dimension_semantics<arbitrary>], iteration_bounds = array<i64: 1>, scalar_prefetch = 0 : i64, scratch_operands = 1 : i64, tpu.core_type = #tpu.core_type<tc>, window_params = [{transform_indices = @transform_0, window_bounds = array<i64: 8, 1>}, {transform_indices = @transform_1, window_bounds = array<i64: 8, 1>}, {transform_indices = @transform_2, window_bounds = array<i64: 8, 1>}, {pipeline_mode = #tpu.pipeline_mode<synchronous>, transform_indices = @transform_3, window_bounds = array<i64: 32, 32>}, {pipeline_mode = #tpu.pipeline_mode<synchronous>, transform_indices = @transform_4, window_bounds = array<i64: 40, 32>}, {pipeline_mode = #tpu.pipeline_mode<synchronous>, transform_indices = @transform_5, window_bounds = array<i64: 8, 128>}]} {
    %c0_i32 = arith.constant 0 : i32
    %0 = arith.cmpi eq, %arg0, %c0_i32 : i32
    %1 = arith.extui %0 : i1 to i32
    %c0_i32_0 = arith.constant 0 : i32
    %2 = arith.cmpi ne, %1, %c0_i32_0 : i32
    scf.if %2 {
      %cst_28 = arith.constant 0.000000e+00 : f32
      %66 = vector.broadcast %cst_28 : f32 to vector<1x1xf32>
      %c0_29 = arith.constant 0 : index
      %c0_30 = arith.constant 0 : index
      %67 = vector.load %arg7[%c0_29, %c0_30] : memref<1x1xf32, #tpu.memory_space<vmem>>, vector<1x1xf32>
      tpu.vector_store %arg7[%c0_29, %c0_30], %66 {strides = array<i32>} : memref<1x1xf32, #tpu.memory_space<vmem>>, vector<1x1xf32>,
    } else {
    }
    %c0 = arith.constant 0 : index
    %c0_1 = arith.constant 0 : index
    %3 = vector.load %arg1[%c0, %c0_1] : memref<8x1xi32, #tpu.memory_space<vmem>>, vector<8x1xi32>
    %c0_2 = arith.constant 0 : index
    %c0_3 = arith.constant 0 : index
    %4 = vector.load %arg2[%c0_2, %c0_3] : memref<8x1xi32, #tpu.memory_space<vmem>>, vector<8x1xi32>
    %5 = tpu.iota {dimensions = array<i32: 1>} : vector<8x32xi32>
    %6 = vector.broadcast %3 : vector<8x1xi32> to vector<8x32xi32>
    %7 = arith.cmpi eq, %6, %5 : vector<8x32xi32>
    %8 = arith.extui %7 : vector<8x32xi1> to vector<8x32xi32>
    %9 = arith.sitofp %8 : vector<8x32xi32> to vector<8x32xf32>
    %10 = tpu.iota {dimensions = array<i32: 1>} : vector<8x40xi32>
    %11 = vector.broadcast %4 : vector<8x1xi32> to vector<8x40xi32>
    %12 = arith.cmpi eq, %11, %10 : vector<8x40xi32>
    %13 = arith.extui %12 : vector<8x40xi1> to vector<8x40xi32>
    %14 = arith.sitofp %13 : vector<8x40xi32> to vector<8x40xf32>
    %c0_4 = arith.constant 0 : index
    %c0_5 = arith.constant 0 : index
    %15 = vector.load %arg4[%c0_4, %c0_5] : memref<32x32xf32, #tpu.memory_space<vmem>>, vector<32x32xf32>
    %cst = arith.constant dense<0.000000e+00> : vector<8x32xf32>
    %16 = tpu.matmul %9, %15, %cst {dimension_numbers = #tpu.dot_dimension_numbers<[1], [0], [0], [1], [0, 0, 1, 1], [], []>} : vector<8x32xf32>, vector<32x32xf32>, vector<8x32xf32> -> vector<8x32xf32>
    %c0_6 = arith.constant 0 : index
    %c0_7 = arith.constant 0 : index
    %17 = vector.load %arg5[%c0_6, %c0_7] : memref<40x32xf32, #tpu.memory_space<vmem>>, vector<40x32xf32>
    %cst_8 = arith.constant dense<0.000000e+00> : vector<8x32xf32>
    %18 = tpu.matmul %14, %17, %cst_8 {dimension_numbers = #tpu.dot_dimension_numbers<[1], [0], [0], [1], [0, 0, 1, 1], [], []>} : vector<8x40xf32>, vector<40x32xf32>, vector<8x32xf32> -> vector<8x32xf32>
    %c0_9 = arith.constant 0 : index
    %c0_10 = arith.constant 0 : index
    %19 = vector.load %arg7[%c0_9, %c0_10] : memref<1x1xf32, #tpu.memory_space<vmem>>, vector<1x1xf32>
    %c0_11 = arith.constant 0 : index
    %c0_12 = arith.constant 0 : index
    %20 = vector.load %arg3[%c0_11, %c0_12] : memref<8x1xf32, #tpu.memory_space<vmem>>, vector<8x1xf32>
    %c8_i32 = arith.constant 8 : i32
    %21 = arith.muli %arg0, %c8_i32 : i32
    %22 = arith.mulf %16, %18 : vector<8x32xf32>
    %cst_13 = arith.constant dense<0.000000e+00> : vector<8xf32>
    %23 = vector.multi_reduction <add>, %22, %cst_13 [1] : vector<8x32xf32> to vector<8xf32>
    %24 = vector.shape_cast %23 : vector<8xf32> to vector<8x1xf32>
    %cst_14 = arith.constant 0.000000e+00 : f32
    %25 = vector.broadcast %cst_14 : f32 to vector<8x1xf32>
    %26 = arith.subf %25, %24 : vector<8x1xf32>
    %cst_15 = arith.constant 0.000000e+00 : f32
    %27 = vector.broadcast %cst_15 : f32 to vector<8x1xf32>
    %28 = arith.maximumf %26, %27 : vector<8x1xf32>
    %29 = math.absf %24 : vector<8x1xf32>
    %cst_16 = arith.constant 0.000000e+00 : f32
    %30 = vector.broadcast %cst_16 : f32 to vector<8x1xf32>
    %31 = arith.subf %30, %29 : vector<8x1xf32>
    %32 = math.exp %31 : vector<8x1xf32>
    %33 = math.log1p %32 : vector<8x1xf32>
    %34 = arith.addf %28, %33 : vector<8x1xf32>
    %cst_17 = arith.constant 0.000000e+00 : f32
    %35 = vector.broadcast %cst_17 : f32 to vector<8x1xf32>
    %36 = arith.subf %35, %34 : vector<8x1xf32>
    %37 = arith.subf %20, %36 : vector<8x1xf32>
    %38 = arith.mulf %16, %16 : vector<8x32xf32>
    %cst_18 = arith.constant 1.000000e-01 : f32
    %39 = vector.broadcast %cst_18 : f32 to vector<8x32xf32>
    %40 = arith.mulf %39, %38 : vector<8x32xf32>
    %41 = arith.mulf %18, %18 : vector<8x32xf32>
    %cst_19 = arith.constant 5.000000e-02 : f32
    %42 = vector.broadcast %cst_19 : f32 to vector<8x32xf32>
    %43 = arith.mulf %42, %41 : vector<8x32xf32>
    %44 = arith.addf %40, %43 : vector<8x32xf32>
    %cst_20 = arith.constant dense<0.000000e+00> : vector<8xf32>
    %45 = vector.multi_reduction <add>, %44, %cst_20 [1] : vector<8x32xf32> to vector<8xf32>
    %46 = vector.shape_cast %45 : vector<8xf32> to vector<8x1xf32>
    %47 = arith.mulf %37, %37 : vector<8x1xf32>
    %48 = arith.addf %47, %46 : vector<8x1xf32>
    %49 = tpu.iota {dimensions = array<i32: 0>} : vector<8x1xi32>
    %50 = vector.broadcast %21 : i32 to vector<8x1xi32>
    %51 = arith.addi %50, %49 : vector<8x1xi32>
    %c8_i32_21 = arith.constant 8 : i32
    %52 = vector.broadcast %c8_i32_21 : i32 to vector<8x1xi32>
    %53 = arith.cmpi slt, %51, %52 : vector<8x1xi32>
    %cst_22 = arith.constant 0.000000e+00 : f32
    %54 = vector.broadcast %cst_22 : f32 to vector<8x1xf32>
    %55 = arith.select %53, %48, %54 : vector<8x1xi1>, vector<8x1xf32>
    %56 = vector.shape_cast %55 : vector<8x1xf32> to vector<1x8x1xf32>
    %cst_23 = arith.constant dense<0.000000e+00> : vector<1xf32>
    %57 = vector.multi_reduction <add>, %56, %cst_23 [1, 2] : vector<1x8x1xf32> to vector<1xf32>
    %58 = vector.shape_cast %57 : vector<1xf32> to vector<1x1x1xf32>
    %59 = vector.extract %58[0, 0, 0] : f32 from vector<1x1x1xf32>
    %60 = vector.broadcast %59 : f32 to vector<1x1xf32>
    %61 = arith.addf %19, %60 : vector<1x1xf32>
    %c0_24 = arith.constant 0 : index
    %c0_25 = arith.constant 0 : index
    %62 = vector.load %arg7[%c0_24, %c0_25] : memref<1x1xf32, #tpu.memory_space<vmem>>, vector<1x1xf32>
    tpu.vector_store %arg7[%c0_24, %c0_25], %61 {strides = array<i32>} : memref<1x1xf32, #tpu.memory_space<vmem>>, vector<1x1xf32>,
    %c0_i32_26 = arith.constant 0 : i32
    %63 = arith.cmpi eq, %arg0, %c0_i32_26 : i32
    %64 = arith.extui %63 : i1 to i32
    %c0_i32_27 = arith.constant 0 : i32
    %65 = arith.cmpi ne, %64, %c0_i32_27 : i32
    scf.if %65 {
      %c0_28 = arith.constant 0 : index
      %c0_29 = arith.constant 0 : index
      %66 = vector.load %arg7[%c0_28, %c0_29] : memref<1x1xf32, #tpu.memory_space<vmem>>, vector<1x1xf32>
      %cst_30 = arith.constant 1.250000e-01 : f32
      %67 = vector.broadcast %cst_30 : f32 to vector<1x1xf32>
      %68 = arith.mulf %66, %67 : vector<1x1xf32>
      %69 = vector.shape_cast %68 : vector<1x1xf32> to vector<1x1xf32>
      %70 = vector.broadcast %69 : vector<1x1xf32> to vector<8x128xf32>
      %c0_31 = arith.constant 0 : index
      %c0_32 = arith.constant 0 : index
      %71 = vector.load %arg6[%c0_31, %c0_32] : memref<8x128xf32, #tpu.memory_space<vmem>>, vector<8x128xf32>
      tpu.vector_store %arg6[%c0_31, %c0_32], %70 {strides = array<i32>} : memref<8x128xf32, #tpu.memory_space<vmem>>, vector<8x128xf32>,
    } else {
    }
    return
  }
  func.func @transform_0(%arg0: i32) -> (i32, i32) {
    %c0_i32 = arith.constant 0 : i32
    %c0_i32_0 = arith.constant 0 : i32
    return %arg0, %c0_i32 : i32, i32
  }
  func.func @transform_1(%arg0: i32) -> (i32, i32) {
    %c0_i32 = arith.constant 0 : i32
    %c0_i32_0 = arith.constant 0 : i32
    return %arg0, %c0_i32 : i32, i32
  }
  func.func @transform_2(%arg0: i32) -> (i32, i32) {
    %c0_i32 = arith.constant 0 : i32
    %c0_i32_0 = arith.constant 0 : i32
    return %arg0, %c0_i32 : i32, i32
  }
  func.func @transform_3(%arg0: i32) -> (i32, i32) {
    %c0_i32 = arith.constant 0 : i32
    %c0_i32_0 = arith.constant 0 : i32
    %c0_i32_1 = arith.constant 0 : i32
    return %c0_i32, %c0_i32_0 : i32, i32
  }
  func.func @transform_4(%arg0: i32) -> (i32, i32) {
    %c0_i32 = arith.constant 0 : i32
    %c0_i32_0 = arith.constant 0 : i32
    %c0_i32_1 = arith.constant 0 : i32
    return %c0_i32, %c0_i32_0 : i32, i32
  }
  func.func @transform_5(%arg0: i32) -> (i32, i32) {
    %c0_i32 = arith.constant 0 : i32
    %c0_i32_0 = arith.constant 0 : i32
    %c0_i32_1 = arith.constant 0 : i32
    return %c0_i32, %c0_i32_0 : i32, i32
  }
}

</mosaic_0001>

<llo_original>
// kernel: tpu_custom_call.1
$region0: #{tpu_custom_call.1}
  #allocation0 [shape = 'u32[]', space=smem, size = 0x4, offset = 0x4, fixed_abs, tag = 'smem constant byte address 0x4 - core index']
  #allocation1 [shape = 'u32[144,128]{1,0:T(1,128)}', space=vmem, size = 0x12000, scoped, tag = 'internal scratch']
  #allocation2 [shape = 'f32[1,1]{1,0:T(1,128)}', space=vmem, size = 0x200, scoped, tag = 'scratch operand']
  %s0 = inlined_call_operand.vmem [shape: s32[8,1], index: 0, kind: input, shape index: {}]
  %s1 = inlined_call_operand.vmem [shape: s32[8,1], index: 1, kind: input, shape index: {}]
  %s2 = inlined_call_operand.vmem [shape: f32[8,1], index: 2, kind: input, shape index: {}]
  %s3 = inlined_call_operand.vmem [shape: f32[32,32], index: 3, kind: input, shape index: {}]
  %s4 = inlined_call_operand.vmem [shape: f32[40,32], index: 4, kind: input, shape index: {}]
  %s5 = inlined_call_operand.hbm [shape: f32[8,128], index: 5, kind: output, shape index: {}]
  %s6 = sld [smem:[#allocation0]]
  $region38: #{tpu_custom_call.1} parent=0
    _
  %s8 = ssub.s32 1, %s6
  %s9 = scalar_select 0, %s8, %s6
  $region1: #{tpu_custom_call.1} parent=0
    #allocation3 [shape = 'u8[4096]{0}', space=vmem, size = 0x1000, scoped, tag = 'output window, operand 0, single buffered']
    #allocation4 [shape = 's32[1]{0}', space=sflag, size = 0x4, scoped, tag = 'scoped memory for tpu_custom_call.1']
    %10 = vsyncpa [#allocation4], 0
    // Predicated region
    $region2: #{tpu_custom_call.1} parent=1 // pred_check
      _
    $region3: #{tpu_custom_call.1} parent=1 // pred_check_branch
      %12 = sbr.rel (0) target = $region5
    $region4: #{tpu_custom_call.1} parent=1 // pred_region
      _
    $region5: #{tpu_custom_call.1} parent=1 // pred_fallthru
      _
    // Predicated region
    $region6: #{tpu_custom_call.1} parent=1 // pred_check
      _
    $region7: #{tpu_custom_call.1} parent=1 // pred_check_branch
      %14 = sbr.rel (0) target = $region9
    $region8: #{tpu_custom_call.1} parent=1 // pred_region
      _
    $region9: #{tpu_custom_call.1} parent=1 // pred_fallthru
      _
    // Predicated region
    $region10: #{tpu_custom_call.1} parent=1 // pred_check
      _
    $region11: #{tpu_custom_call.1} parent=1 // pred_check_branch
      %16 = sbr.rel (0) target = $region13
    $region12: #{tpu_custom_call.1} parent=1 // pred_region
      _
    $region13: #{tpu_custom_call.1} parent=1 // pred_fallthru
      _
    // Predicated region
    $region14: #{tpu_custom_call.1} parent=1 // pred_check
      _
    $region15: #{tpu_custom_call.1} parent=1 // pred_check_branch
      %18 = sbr.rel (0) target = $region17
    $region16: #{tpu_custom_call.1} parent=1 // pred_region
      _
    $region17: #{tpu_custom_call.1} parent=1 // pred_fallthru
      _
    // Predicated region
    $region18: #{tpu_custom_call.1} parent=1 // pred_check
      _
    $region19: #{tpu_custom_call.1} parent=1 // pred_check_branch
      %20 = sbr.rel (0) target = $region21
    $region20: #{tpu_custom_call.1} parent=1 // pred_region
      _
    $region21: #{tpu_custom_call.1} parent=1 // pred_fallthru
      _
    %p21 = scmp.eq.s32.totalorder 0, 0
    // Predicated region
    $region22: #{tpu_custom_call.1} parent=1 // pred_check
      %p22 = pneg %p21
    $region23: #{tpu_custom_call.1} parent=1 // pred_check_branch
      %24 = sbr.rel (%p22) target = $region25
    $region24: #{tpu_custom_call.1} parent=1 // pred_region
      %vm25 = vcmask 0
      %26 = vst.msk [vmem:[#allocation2] sm:$0x1] %vm25, 0.0
    $region25: #{tpu_custom_call.1} parent=1 // pred_fallthru
      _
    %v27 = vld [vmem:[%s0] sm:$0xff]
    %v28 = vld [vmem:[%s1] sm:$0xff]
    %v29 = vlaneseq
    %v30 = vand.u32 %v29, 127
    %31 = vset.pattern.permute.xlu0 0
    %32 = vperm.xlu0 %31, %v27
    %v33 = vpop.permute.xlu0 %32
    %vm34 = vcmp.eq.s32.totalorder %v33, %v30
    %v35 = vsel %vm34, 1, 0
    %v36 = vcvt.s32.f32 %v35
    %37 = vset.pattern.permute.xlu0 0
    %38 = vperm.xlu0 %37, %v28
    %v39 = vpop.permute.xlu0 %38
    %vm40 = vcmp.eq.s32.totalorder %v39, %v30
    %v41 = vsel %vm40, 1, 0
    %v42 = vcvt.s32.f32 %v41
    %v43 = vld [vmem:[%s3] sm:$0xff]
    %v44 = vld [vmem:[%s3 + $0x8] sm:$0xff]
    %v45 = vld [vmem:[%s3 + $0x10] sm:$0xff]
    %v46 = vld [vmem:[%s3 + $0x18] sm:$0xff]
    %vm47 = vcmask 261120
    %v49 = vsel %vm47, %v36, 0
    %51 = vmatprep.subr.mxu0 0.0
    %52 = vmatpush1.msra.mxu0 0.0
    %53 = vmatprep.subr.mxu0 0.0
    %54 = vmatpush1.msra.mxu0 0.0
    %55 = vmatprep.subr.mxu0 0.0
    %56 = vmatpush1.msra.mxu0 0.0
    %57 = vmatprep.subr.mxu0 0.0
    %58 = vmatpush1.msra.mxu0 0.0
    %59 = vmatprep.subr.mxu0 0.0
    %60 = vmatpush1.msra.mxu0 0.0
    %61 = vmatprep.subr.mxu0 0.0
    %62 = vmatpush1.msra.mxu0 0.0
    %63 = vmatprep.subr.mxu0 0.0
    %64 = vmatpush1.msra.mxu0 0.0
    %65 = vmatprep.subr.mxu0 0.0
    %66 = vmatpush1.msra.mxu0 0.0
    %67 = vmatprep.subr.mxu0 0.0
    %68 = vmatpush1.msra.mxu0 0.0
    %69 = vmatprep.subr.mxu0 0.0
    %70 = vmatpush1.msra.mxu0 0.0
    %71 = vmatprep.subr.mxu0 0.0
    %72 = vmatpush1.msra.mxu0 0.0
    %73 = vmatprep.subr.mxu0 0.0
    %74 = vmatpush1.msra.mxu0 0.0
    %75 = vmatprep.subr.mxu0 0.0
    %76 = vmatpush1.msra.mxu0 %v46
    %77 = vmatprep.subr.mxu0 0.0
    %78 = vmatpush1.msra.mxu0 %v45
    %79 = vmatprep.subr.mxu0 0.0
    %80 = vmatpush1.msra.mxu0 %v44
    %81 = vmatprep.subr.mxu0 0.0
    %82 = vmatpush1.msra.mxu0 %v43
    %83 = vmatprep.subr.mxu0 0.0
    %84 = vmatpush2.msra.mxu0 0.0
    %85 = vmatprep.subr.mxu0 0.0
    %86 = vmatpush2.msra.mxu0 0.0
    %87 = vmatprep.subr.mxu0 0.0
    %88 = vmatpush2.msra.mxu0 0.0
    %89 = vmatprep.subr.mxu0 0.0
    %90 = vmatpush2.msra.mxu0 0.0
    %91 = vmatprep.subr.mxu0 0.0
    %92 = vmatpush2.msra.mxu0 0.0
    %93 = vmatprep.subr.mxu0 0.0
    %94 = vmatpush2.msra.mxu0 0.0
    %95 = vmatprep.subr.mxu0 0.0
    %96 = vmatpush2.msra.mxu0 0.0
    %97 = vmatprep.subr.mxu0 0.0
    %98 = vmatpush2.msra.mxu0 0.0
    %99 = vmatprep.subr.mxu0 0.0
    %100 = vmatpush2.msra.mxu0 0.0
    %101 = vmatprep.subr.mxu0 0.0
    %102 = vmatpush2.msra.mxu0 0.0
    %103 = vmatprep.subr.mxu0 0.0
    %104 = vmatpush2.msra.mxu0 0.0
    %105 = vmatprep.subr.mxu0 0.0
    %106 = vmatpush2.msra.mxu0 0.0
    %107 = vmatprep.subr.mxu0 0.0
    %108 = vmatpush2.msra.mxu0 0.0
    %109 = vmatprep.subr.mxu0 0.0
    %110 = vmatpush2.msra.mxu0 0.0
    %111 = vmatprep.subr.mxu0 0.0
    %112 = vmatpush2.msra.mxu0 0.0
    %113 = vmatprep.subr.mxu0 0.0
    %114 = vmatpush2.msra.mxu0 0.0
    %115 = vmatprep.mubr.f32.mxu0 0.0
    %116 = vmatmul.mubr.f32.gmra.mxu0 %v49
    %v117 = vpop.f32.mrf.mxu0
    %v118 = vadd.f32 0.0, %v117
    %v119 = vpop.f32.mrf.mxu0
    %120 = vdwg.mxu0
    %v121 = vld [vmem:[%s4] sm:$0xff]
    %v122 = vld [vmem:[%s4 + $0x8] sm:$0xff]
    %v123 = vld [vmem:[%s4 + $0x10] sm:$0xff]
    %v124 = vld [vmem:[%s4 + $0x18] sm:$0xff]
    %v125 = vld [vmem:[%s4 + $0x20] sm:$0xff]
    %vm126 = vcmask 326656
    %v128 = vsel %vm126, %v42, 0
    %130 = vmatprep.subr.mxu0 0.0
    %131 = vmatpush1.msra.mxu0 0.0
    %132 = vmatprep.subr.mxu0 0.0
    %133 = vmatpush1.msra.mxu0 0.0
    %134 = vmatprep.subr.mxu0 0.0
    %135 = vmatpush1.msra.mxu0 0.0
    %136 = vmatprep.subr.mxu0 0.0
    %137 = vmatpush1.msra.mxu0 0.0
    %138 = vmatprep.subr.mxu0 0.0
    %139 = vmatpush1.msra.mxu0 0.0
    %140 = vmatprep.subr.mxu0 0.0
    %141 = vmatpush1.msra.mxu0 0.0
    %142 = vmatprep.subr.mxu0 0.0
    %143 = vmatpush1.msra.mxu0 0.0
    %144 = vmatprep.subr.mxu0 0.0
    %145 = vmatpush1.msra.mxu0 0.0
    %146 = vmatprep.subr.mxu0 0.0
    %147 = vmatpush1.msra.mxu0 0.0
    %148 = vmatprep.subr.mxu0 0.0
    %149 = vmatpush1.msra.mxu0 0.0
    %150 = vmatprep.subr.mxu0 0.0
    %151 = vmatpush1.msra.mxu0 0.0
    %152 = vmatprep.subr.mxu0 0.0
    %153 = vmatpush1.msra.mxu0 %v125
    %154 = vmatprep.subr.mxu0 0.0
    %155 = vmatpush1.msra.mxu0 %v124
    %156 = vmatprep.subr.mxu0 0.0
    %157 = vmatpush1.msra.mxu0 %v123
    %158 = vmatprep.subr.mxu0 0.0
    %159 = vmatpush1.msra.mxu0 %v122
    %160 = vmatprep.subr.mxu0 0.0
    %161 = vmatpush1.msra.mxu0 %v121
    %162 = vmatprep.subr.mxu0 0.0
    %163 = vmatpush2.msra.mxu0 0.0
    %164 = vmatprep.subr.mxu0 0.0
    %165 = vmatpush2.msra.mxu0 0.0
    %166 = vmatprep.subr.mxu0 0.0
    %167 = vmatpush2.msra.mxu0 0.0
    %168 = vmatprep.subr.mxu0 0.0
    %169 = vmatpush2.msra.mxu0 0.0
    %170 = vmatprep.subr.mxu0 0.0
    %171 = vmatpush2.msra.mxu0 0.0
    %172 = vmatprep.subr.mxu0 0.0
    %173 = vmatpush2.msra.mxu0 0.0
    %174 = vmatprep.subr.mxu0 0.0
    %175 = vmatpush2.msra.mxu0 0.0
    %176 = vmatprep.subr.mxu0 0.0
    %177 = vmatpush2.msra.mxu0 0.0
    %178 = vmatprep.subr.mxu0 0.0
    %179 = vmatpush2.msra.mxu0 0.0
    %180 = vmatprep.subr.mxu0 0.0
    %181 = vmatpush2.msra.mxu0 0.0
    %182 = vmatprep.subr.mxu0 0.0
    %183 = vmatpush2.msra.mxu0 0.0
    %184 = vmatprep.subr.mxu0 0.0
    %185 = vmatpush2.msra.mxu0 0.0
    %186 = vmatprep.subr.mxu0 0.0
    %187 = vmatpush2.msra.mxu0 0.0
    %188 = vmatprep.subr.mxu0 0.0
    %189 = vmatpush2.msra.mxu0 0.0
    %190 = vmatprep.subr.mxu0 0.0
    %191 = vmatpush2.msra.mxu0 0.0
    %192 = vmatprep.subr.mxu0 0.0
    %193 = vmatpush2.msra.mxu0 0.0
    %194 = vmatprep.mubr.f32.mxu0 0.0
    %195 = vmatmul.mubr.f32.gmra.mxu0 %v128
    %v196 = vpop.f32.mrf.mxu0
    %v197 = vadd.f32 0.0, %v196
    %v198 = vpop.f32.mrf.mxu0
    %199 = vdwg.mxu0
    %v200 = vld [vmem:[#allocation2] sm:$0x1]
    %v201 = vld [vmem:[%s2] sm:$0xff]
    %s202 = smul.u32 0, 8
    %v203 = vmul.f32 %v118, %v197
    %v204 = vsel %vm47, %v203, 0.0
    %205 = vadd.xlane.f32.xlu0 %v204
    %v206 = vpop.xlane.xlu0 %205
    %v207 = vsub.f32 0.0, %v206
    %v208 = vmax.f32 %v207, 0.0
    %v209 = vand.u32 2147483647, %v206
    %v210 = vsub.f32 0.0, %v209
    %v211 = vmul.f32 %v210, 1.442695
    %v212 = vpow.pop %v211
    %v213 = vadd.f32 %v212, 1.0
    %v214 = vlog2.pop %v213
    %v215 = vmul.f32 %v214, 0.6931472
    %v216 = vmul.f32 -0.5, %v212
    %v217 = vadd.f32 %v216, 1.0
    %v218 = vmul.f32 %v217, %v212
    %v219 = vand.u32 2147483647, %v212
    %vm220 = vcmp.lt.f32.partialorder %v219, 0.0004427343
    %v221 = vsel %vm220, %v218, %v215
    %v222 = vadd.f32 %v208, %v221
    %v223 = vsub.f32 0.0, %v222
    %v224 = vsub.f32 %v201, %v223
    %v225 = vmul.f32 %v118, %v118
    %v226 = vmul.f32 %v225, 0.1
    %v227 = vmul.f32 %v197, %v197
    %v228 = vmul.f32 %v227, 0.05
    %v229 = vadd.f32 %v226, %v228
    %v230 = vsel %vm47, %v229, 0.0
    %231 = vadd.xlane.f32.xlu0 %v230
    %v232 = vpop.xlane.xlu0 %231
    %v233 = vmul.f32 %v224, %v224
    %v234 = vadd.f32 %v233, %v232
    %v235 = vlaneseq
    %v236 = vshrl.u32 %v235, 7
    %v237 = vstv %s202
    %v238 = vadd.s32 %v237, %v236
    %vm239 = vcmp.lt.s32.totalorder %v238, 8
    %v240 = vsel %vm239, %v234, 0.0
    %vm241 = vcmask 7168
    %v242 = vsel %vm241, %v240, 0.0
    %243 = vadd.xlane.f32.xlu0 %v242
    %v244 = vpop.xlane.xlu0 %243
    %v245 = vrot.slane %v244, 4
    %v246 = vadd.f32 %v244, %v245
    %v247 = vrot.slane %v246, 2
    %v248 = vadd.f32 %v246, %v247
    %v249 = vrot.slane %v248, 1
    %v250 = vadd.f32 %v248, %v249
    %s251 = vtos %v250
    %v252 = vstv %s251
    %v253 = vadd.f32 %v200, %v252
    %vm254 = vcmask 0
    %255 = vst.msk [vmem:[#allocation2] sm:$0x1] %vm254, %v253
    // Predicated region
    $region26: #{tpu_custom_call.1} parent=1 // pred_check
      %p256 = pneg %p21
    $region27: #{tpu_custom_call.1} parent=1 // pred_check_branch
      %258 = sbr.rel (%p256) target = $region29
    $region28: #{tpu_custom_call.1} parent=1 // pred_region
      %v259 = vld [vmem:[#allocation2] sm:$0x1]
      %v260 = vmul.f32 %v259, 0.125
      %v262 = vlaneseq
      %v263 = vshrl.u32 %v262, 7
      %v264 = vsub.s32 0, %v263
      %v265 = vrot.slane %v260, %v264
      %266 = vset.pattern.permute.xlu0 0
      %267 = vperm.xlu0 %266, %v265
      %v268 = vpop.permute.xlu0 %267
      %270 = vst [vmem:[#allocation3] sm:$0xff] %v268
    $region29: #{tpu_custom_call.1} parent=1 // pred_fallthru
      _
    // Predicated region
    $region30: #{tpu_custom_call.1} parent=1 // pred_check
      _
    $region31: #{tpu_custom_call.1} parent=1 // pred_check_branch
      %272 = sbr.rel (0) target = $region33
    $region32: #{tpu_custom_call.1} parent=1 // pred_region
      %s274 = ssub.s32 128, 128
      %275 = vsyncadd [#allocation4], %s274
      %s277 = sshll.u32 [#allocation3], 4
      %s278 = int_to_ptr.vmem [resolvable:$true] %s277
      %280 = dma.vmem_to_hbm [thread:$0]  %s278, 128, %s5, [#allocation4]
    $region33: #{tpu_custom_call.1} parent=1 // pred_fallthru
      _
    // Predicated region
    $region34: #{tpu_custom_call.1} parent=1 // pred_check
      _
    $region35: #{tpu_custom_call.1} parent=1 // pred_check_branch
      %282 = sbr.rel (0) target = $region37
    $region36: #{tpu_custom_call.1} parent=1 // pred_region
      %283 = dma.done [#allocation4], 128
    $region37: #{tpu_custom_call.1} parent=1 // pred_fallthru
      _
    %284 = vsyncpa [#allocation4], 1

</llo_original>
